<compile_context>
chip_gen: v7x
topology: tpu7x:2x2x1
jax: 0.10.0
libtpu: 0.0.40
codegen_flags: <defaults>
</compile_context>

<pallas_src>
import jax
import jax.numpy as jnp
from jax.experimental import pallas as pl
from jax.experimental.pallas import tpu as pltpu

_MIB = 1 << 20


def _cdiv(a: int, b: int) -> int:
    return -(-a // b)


def _round_up(x: int, m: int) -> int:
    return ((x + m - 1) // m) * m


def _simproc_kernel(x1_ref, x2_ref, o_ref):
    # x1_ref, x2_ref: (tb, D) VMEM tiles; o_ref: (tb, 3*D) VMEM tile.
    D = x1_ref.shape[1]
    x1 = x1_ref[...]
    x2 = x2_ref[...]
    # Concat along the feature (lane) axis: three static slice stores.
    # Lane-dense (unmasked vst) whenever D % 128 == 0.
    # TODO(synk): for ragged D, padding D to a multiple of 128 at the model
    # level (or the Linear fusion above) is what makes these stores lane-dense.
    o_ref[:, 0:D] = x1
    o_ref[:, D:2 * D] = x2
    o_ref[:, 2 * D:3 * D] = x1 * x2


def _tpu_generation():
    """(vmem_capacity_bytes, two_tensorcores_per_chip) with safe fallbacks."""
    vmem_cap = 128 * _MIB
    two_tc = False
    try:
        info = pltpu.get_tpu_info()
        cap = getattr(info, "vmem_capacity_bytes", None)
        if cap:
            vmem_cap = int(cap)
    except Exception:
        pass
    try:
        kind = jax.devices()[0].device_kind.lower()
        if "v7" in kind:
            two_tc = True
    except Exception:
        pass
    # v7x: 64 MiB VMEM per TensorCore, 2 TCs per chip.
    if vmem_cap <= 64 * _MIB:
        two_tc = True
    return vmem_cap, two_tc


def _pick_tile_rows(B: int, D: int, itemsize: int,
                    vmem_cap: int, two_tc: bool) -> int:
    """Largest sublane-aligned batch tile within a generation-aware VMEM budget."""
    # Sublane packing: 8 rows for 4-byte dtypes, 16 for 2-byte, 32 for 1-byte.
    pack = max(8, 32 // max(1, itemsize))
    row_bytes = 5 * D * itemsize                 # 2*D input + 3*D output per row
    # ~3/8 of VMEM capacity for the double-buffered pipeline buffers:
    #   ~48 MiB on v5e/v6e (128 MiB VMEM), ~24 MiB on v7x (64 MiB per TC).
    budget = (vmem_cap * 3) // 8
    tb = (budget // (2 * row_bytes)) // pack * pack
    tb = max(pack, min(tb, _round_up(B, pack)))

    # Keep >= min_steps grid steps (pipeline overlap; 2 steps/core on v7x), but
    # never shrink a step's HBM payload below the per-step floor so the fixed
    # ~0.35 us per-step overhead stays small.
    min_steps = 4 if two_tc else 2
    payload_floor = (10 if two_tc else 5) * _MIB
    if B >= min_steps * pack:
        tb_steps = max(pack, _round_up(_cdiv(B, min_steps), pack))
        tb_floor = max(pack, _round_up(_cdiv(payload_floor, row_bytes), pack))
        tb = min(tb, min(max(tb_steps, tb_floor), _round_up(B, pack)))

    # 2-TC parts: prefer an even number of grid steps so both cores balance.
    if two_tc:
        steps = _cdiv(B, tb)
        if steps > 1 and steps % 2 == 1:
            cand = max(pack, _round_up(_cdiv(B, steps + 1), pack))
            if _cdiv(B, cand) % 2 == 0:
                tb = cand
    return tb


def similarity_input_processor(x1: jax.Array, x2: jax.Array,
                               *, tb: int | None = None) -> jax.Array:
    """Pallas equivalent of SimilarityInputProcessor.forward for (B, D) inputs."""
    assert x1.shape == x2.shape and x1.dtype == x2.dtype
    assert x1.ndim == 2, "kernel implements the 2-D (B, D) case of the dim=1 concat"
    B, D = x1.shape
    itemsize = jnp.dtype(x1.dtype).itemsize
    vmem_cap, two_tc = _tpu_generation()

    pack = max(8, 32 // max(1, itemsize))
    if tb is None:
        tb = _pick_tile_rows(B, D, itemsize, vmem_cap, two_tc)

    # Double-buffered pipeline footprint: (2 inputs + 3x output) * 2 buffers.
    def _footprint(t: int) -> int:
        return 2 * (5 * t * D * itemsize)

    headroom = 8 * _MIB
    ceiling = vmem_cap - 8 * _MIB          # leave room for Mosaic internal scratch
    # If the footprint exceeds the per-generation ceiling, shrink the tile
    # instead of clamping the limit below the footprint.
    while tb > pack and _footprint(tb) + headroom > ceiling:
        tb = max(pack, ((tb // 2) // pack) * pack)
    if _footprint(tb) + headroom > ceiling:
        # Even the smallest sublane-aligned tile does not fit (extremely wide D):
        # bail to XLA instead of a VMEM-overflow compile failure.
        # TODO(synk): add a D-tiled kernel variant for this regime.
        return jnp.concatenate([x1, x2, x1 * x2], axis=1)

    vmem_limit = min(ceiling, max(_footprint(tb) + headroom, 32 * _MIB))

    grid = (_cdiv(B, tb),)
    in_spec = pl.BlockSpec((tb, D), lambda i: (i, 0))
    out_spec = pl.BlockSpec((tb, 3 * D), lambda i: (i, 0))

    cost = pl.CostEstimate(
        flops=B * D,                           # one multiply per element
        transcendentals=0,
        bytes_accessed=5 * B * D * itemsize,   # 2*B*D read + 3*B*D write
    )

    # TODO(synk): on v7x, pltpu.CORE_PARALLEL on the batch axis would make the
    # 2-TensorCore split explicit; "parallel" is kept here for portability.
    return pl.pallas_call(
        _simproc_kernel,
        out_shape=jax.ShapeDtypeStruct((B, 3 * D), x1.dtype),
        grid_spec=pltpu.PrefetchScalarGridSpec(
            num_scalar_prefetch=0,
            grid=grid,
            in_specs=[in_spec, in_spec],
            out_specs=out_spec,
        ),
        compiler_params=pltpu.CompilerParams(
            dimension_semantics=("parallel",),
            vmem_limit_bytes=int(vmem_limit),
        ),
        cost_estimate=cost,
    )(x1, x2)


if __name__ == "__main__":
    key = jax.random.PRNGKey(0)
    k1, k2, k3, k4 = jax.random.split(key, 4)

    # Case 1: small tile-friendly shape (B=8, D=128), auto-picked tile.
    B, D = 8, 128
    x1 = jax.random.normal(k1, (B, D), dtype=jnp.float32)
    x2 = jax.random.normal(k2, (B, D), dtype=jnp.float32)
    out = jax.block_until_ready(similarity_input_processor(x1, x2))
    ref = jnp.concatenate([x1, x2, x1 * x2], axis=1)
    assert out.shape == (B, 3 * D)
    assert jnp.allclose(out, ref), "mismatch vs reference (case 1)"

    # Case 2: multi-step grid with a masked batch tail (B=40, tb=16 -> 3 steps).
    B2, D2 = 40, 128
    y1 = jax.random.normal(k3, (B2, D2), dtype=jnp.float32)
    y2 = jax.random.normal(k4, (B2, D2), dtype=jnp.float32)
    out2 = jax.block_until_ready(similarity_input_processor(y1, y2, tb=16))
    ref2 = jnp.concatenate([y1, y2, y1 * y2], axis=1)
    assert out2.shape == (B2, 3 * D2)
    assert jnp.allclose(out2, ref2), "mismatch vs reference (case 2)"

    print("KERNEL_OK")
</pallas_src>

<mosaic_0001>
module attributes {stable_mosaic.version = 11 : i64} {
  func.func @_simproc_kernel(%arg0: i32, %arg1: memref<8x128xf32, #tpu.memory_space<vmem>>, %arg2: memref<8x128xf32, #tpu.memory_space<vmem>>, %arg3: memref<8x384xf32, #tpu.memory_space<vmem>>) attributes {dimension_semantics = [#tpu.dimension_semantics<parallel>], iteration_bounds = array<i64: 1>, scalar_prefetch = 0 : i64, scratch_operands = 0 : i64, tpu.core_type = #tpu.core_type<tc>, window_params = [{transform_indices = @transform_0, window_bounds = array<i64: 8, 128>}, {transform_indices = @transform_1, window_bounds = array<i64: 8, 128>}, {transform_indices = @transform_2, window_bounds = array<i64: 8, 384>}]} {
    %c0 = arith.constant 0 : index
    %c0_0 = arith.constant 0 : index
    %0 = vector.load %arg1[%c0, %c0_0] : memref<8x128xf32, #tpu.memory_space<vmem>>, vector<8x128xf32>
    %c0_1 = arith.constant 0 : index
    %c0_2 = arith.constant 0 : index
    %1 = vector.load %arg2[%c0_1, %c0_2] : memref<8x128xf32, #tpu.memory_space<vmem>>, vector<8x128xf32>
    %c0_3 = arith.constant 0 : index
    %c0_4 = arith.constant 0 : index
    %2 = vector.load %arg3[%c0_3, %c0_4] : memref<8x384xf32, #tpu.memory_space<vmem>>, vector<8x128xf32>
    tpu.vector_store %arg3[%c0_3, %c0_4], %0 {strides = array<i32>} : memref<8x384xf32, #tpu.memory_space<vmem>>, vector<8x128xf32>,
    %c0_5 = arith.constant 0 : index
    %c128 = arith.constant 128 : index
    %3 = vector.load %arg3[%c0_5, %c128] : memref<8x384xf32, #tpu.memory_space<vmem>>, vector<8x128xf32>
    tpu.vector_store %arg3[%c0_5, %c128], %1 {strides = array<i32>} : memref<8x384xf32, #tpu.memory_space<vmem>>, vector<8x128xf32>,
    %4 = arith.mulf %0, %1 : vector<8x128xf32>
    %c0_6 = arith.constant 0 : index
    %c256 = arith.constant 256 : index
    %5 = vector.load %arg3[%c0_6, %c256] : memref<8x384xf32, #tpu.memory_space<vmem>>, vector<8x128xf32>
    tpu.vector_store %arg3[%c0_6, %c256], %4 {strides = array<i32>} : memref<8x384xf32, #tpu.memory_space<vmem>>, vector<8x128xf32>,
    return
  }
  func.func @transform_0(%arg0: i32) -> (i32, i32) {
    %c0_i32 = arith.constant 0 : i32
    %c0_i32_0 = arith.constant 0 : i32
    return %arg0, %c0_i32 : i32, i32
  }
  func.func @transform_1(%arg0: i32) -> (i32, i32) {
    %c0_i32 = arith.constant 0 : i32
    %c0_i32_0 = arith.constant 0 : i32
    return %arg0, %c0_i32 : i32, i32
  }
  func.func @transform_2(%arg0: i32) -> (i32, i32) {
    %c0_i32 = arith.constant 0 : i32
    %c0_i32_0 = arith.constant 0 : i32
    return %arg0, %c0_i32 : i32, i32
  }
}

</mosaic_0001>

<llo_original>
// kernel: tpu_custom_call.1
$region0: #{tpu_custom_call.1}
  #allocation0 [shape = 'u32[]', space=smem, size = 0x4, offset = 0x4, fixed_abs, tag = 'smem constant byte address 0x4 - core index']
  #allocation1 [shape = 'u32[144,128]{1,0:T(1,128)}', space=vmem, size = 0x12000, scoped, tag = 'internal scratch']
  %s0 = inlined_call_operand.hbm [shape: f32[8,128], index: 0, kind: input, shape index: {}]
  %s1 = inlined_call_operand.hbm [shape: f32[8,128], index: 1, kind: input, shape index: {}]
  %s2 = inlined_call_operand.hbm [shape: f32[8,384], index: 2, kind: output, shape index: {}]
  %s3 = sld [smem:[#allocation0]]
  $region26: #{tpu_custom_call.1} parent=0
    _
  %s5 = ssub.s32 1, %s3
  %s6 = scalar_select 0, %s5, %s3
  $region1: #{tpu_custom_call.1} parent=0
    #allocation2 [shape = 'u8[4096]{0}', space=vmem, size = 0x1000, scoped, tag = 'input window, operand 0, single buffered']
    #allocation3 [shape = 's32[1]{0}', space=sflag, size = 0x4, scoped, tag = 'scoped memory for tpu_custom_call.1']
    #allocation4 [shape = 's32[1]{0}', space=sflag, size = 0x4, scoped, tag = 'scoped memory for tpu_custom_call.1']
    #allocation5 [shape = 'u8[4096]{0}', space=vmem, size = 0x1000, scoped, tag = 'input window, operand 1, single buffered']
    #allocation6 [shape = 's32[1]{0}', space=sflag, size = 0x4, scoped, tag = 'scoped memory for tpu_custom_call.1']
    #allocation7 [shape = 'u8[12288]{0}', space=vmem, size = 0x3000, scoped, tag = 'output window, operand 0, single buffered']
    %7 = vsyncpa [#allocation3], 0
    %8 = vsyncpa [#allocation6], 0
    %9 = vsyncpa [#allocation4], 0
    // Predicated region
    $region2: #{tpu_custom_call.1} parent=1 // pred_check
      _
    $region3: #{tpu_custom_call.1} parent=1 // pred_check_branch
      %11 = sbr.rel (0) target = $region5
    $region4: #{tpu_custom_call.1} parent=1 // pred_region
      %s13 = ssub.s32 128, 128
      %14 = vsyncadd [#allocation3], %s13
      %s16 = sshll.u32 [#allocation2], 4
      %s17 = int_to_ptr.vmem [resolvable:$true] %s16
      %19 = dma.hbm_to_vmem [thread:$0]  %s0, 128, %s17, [#allocation3]
    $region5: #{tpu_custom_call.1} parent=1 // pred_fallthru
      _
    // Predicated region
    $region6: #{tpu_custom_call.1} parent=1 // pred_check
      _
    $region7: #{tpu_custom_call.1} parent=1 // pred_check_branch
      %21 = sbr.rel (0) target = $region9
    $region8: #{tpu_custom_call.1} parent=1 // pred_region
      %s23 = ssub.s32 128, 128
      %24 = vsyncadd [#allocation6], %s23
      %s26 = sshll.u32 [#allocation5], 4
      %s27 = int_to_ptr.vmem [resolvable:$true] %s26
      %29 = dma.hbm_to_vmem [thread:$0]  %s1, 128, %s27, [#allocation6]
    $region9: #{tpu_custom_call.1} parent=1 // pred_fallthru
      _
    // Predicated region
    $region10: #{tpu_custom_call.1} parent=1 // pred_check
      _
    $region11: #{tpu_custom_call.1} parent=1 // pred_check_branch
      %31 = sbr.rel (0) target = $region13
    $region12: #{tpu_custom_call.1} parent=1 // pred_region
      %32 = dma.done [#allocation3], 128
    $region13: #{tpu_custom_call.1} parent=1 // pred_fallthru
      _
    // Predicated region
    $region14: #{tpu_custom_call.1} parent=1 // pred_check
      _
    $region15: #{tpu_custom_call.1} parent=1 // pred_check_branch
      %34 = sbr.rel (0) target = $region17
    $region16: #{tpu_custom_call.1} parent=1 // pred_region
      %35 = dma.done [#allocation6], 128
    $region17: #{tpu_custom_call.1} parent=1 // pred_fallthru
      _
    %v36 = vld [vmem:[#allocation2] sm:$0xff]
    %v37 = vld [vmem:[#allocation5] sm:$0xff]
    %38 = vst [vmem:[#allocation7] sm:$0xff] %v36
    %39 = vst [vmem:[#allocation7 + $0x8] sm:$0xff] %v37
    %v40 = vmul.f32 %v36, %v37
    %41 = vst [vmem:[#allocation7 + $0x10] sm:$0xff] %v40
    // Predicated region
    $region18: #{tpu_custom_call.1} parent=1 // pred_check
      _
    $region19: #{tpu_custom_call.1} parent=1 // pred_check_branch
      %43 = sbr.rel (0) target = $region21
    $region20: #{tpu_custom_call.1} parent=1 // pred_region
      %s45 = ssub.s32 384, 384
      %46 = vsyncadd [#allocation4], %s45
      %s48 = sshll.u32 [#allocation7], 4
      %s49 = int_to_ptr.vmem [resolvable:$true] %s48
      %51 = dma.vmem_to_hbm [thread:$0]  %s49, 384, %s2, [#allocation4]
    $region21: #{tpu_custom_call.1} parent=1 // pred_fallthru
      _
    // Predicated region
    $region22: #{tpu_custom_call.1} parent=1 // pred_check
      _
    $region23: #{tpu_custom_call.1} parent=1 // pred_check_branch
      %53 = sbr.rel (0) target = $region25
    $region24: #{tpu_custom_call.1} parent=1 // pred_region
      %54 = dma.done [#allocation4], 384
    $region25: #{tpu_custom_call.1} parent=1 // pred_fallthru
      _
    %55 = vsyncpa [#allocation3], 1
    %56 = vsyncpa [#allocation6], 1
    %57 = vsyncpa [#allocation4], 1

</llo_original>
